<compile_context>
chip_gen: v7x
topology: tpu7x:2x2x1
jax: 0.10.0
libtpu: 0.0.40
codegen_flags: <defaults>
</compile_context>

<pallas_src>
import functools
import math

import jax
import jax.numpy as jnp
from jax.experimental import pallas as pl
from jax.experimental.pallas import tpu as pltpu

PRIOR_SCALE = 6.0                       # torch.distributions.Normal(0, prior_var=6) -> scale 6
_HALF_LOG_2PI = 0.9189385332046727      # 0.5 * log(2*pi)
_INV_TWO_PRIOR_VAR = 1.0 / (2.0 * PRIOR_SCALE * PRIOR_SCALE)
_C_PRIOR = math.log(PRIOR_SCALE) + _HALF_LOG_2PI


def _softplus(x):
    # numerically stable log(1 + exp(x))
    return jnp.where(x > 20.0, x, jnp.log1p(jnp.exp(jnp.minimum(x, 20.0))))


def _round_up(v, m):
    return (v + m - 1) // m * m


def _pick_tile(dim, candidates):
    for c in candidates:
        if dim % c == 0:
            return c
    return dim


def _vmem_capacity_bytes():
    try:
        return int(pltpu.get_tpu_info().vmem_capacity_bytes)
    except Exception:
        return 64 * 1024 * 1024     # conservative fallback (v7x per-TC VMEM)


_VMEM_CAP = _vmem_capacity_bytes()


def _select_tiling(n_p, in_p, out_p):
    """Generation-gated tile sizes + scoped-VMEM limit + weight-cache decision."""
    big_vmem = _VMEM_CAP >= 96 * (1 << 20)      # v5e/v6e: 128 MiB physical; v7x: 64 MiB per TC
    vmem_limit = (64 if big_vmem else 32) * (1 << 20)
    tb_cands = (1024, 512, 256, 128, 64, 32, 16, 8) if big_vmem else (512, 256, 128, 64, 32, 16, 8)
    tc_cands = (1024, 512, 256, 128) if big_vmem else (512, 256, 128)

    tb = _pick_tile(n_p, tb_cands)
    tk = _pick_tile(in_p, tc_cands)
    to = _pick_tile(out_p, tc_cands)

    def footprint(tb_, tk_, to_):
        # per-step live blocks (f32), double-buffered by the pipeline
        per_step = (tb_ * tk_            # x tile
                    + 3 * tk_ * to_      # w_mu / w_rho / w_eps tiles
                    + 3 * to_            # bias tiles
                    + tb_ * to_          # output tile (also the accumulator)
                    + 2 * 8 * 128        # lp / lq partial blocks
                    ) * 4
        return 2 * per_step

    budget = int(0.70 * vmem_limit)
    while footprint(tb, tk, to) > budget:
        # all candidates are powers of two, so halving preserves divisibility
        if tk >= to and tk > 128:
            tk //= 2
        elif to > 128:
            to //= 2
        elif tb > 8:
            tb //= 2
        else:
            break

    n_i = n_p // tb
    cache_bytes = in_p * to * 4
    cache_w = (n_i > 1) and (footprint(tb, tk, to) + cache_bytes <= int(0.85 * vmem_limit))
    return tb, tk, to, vmem_limit, cache_w


def _bbb_kernel(x_ref, w_mu_ref, w_rho_ref, w_eps_ref,
                b_mu_ref, b_rho_ref, b_eps_ref,
                out_ref, lp_ref, lq_ref,
                *maybe_cache,
                in_f, out_f, tk, to, cache_w):
    # Grid = (j: OUT tiles [parallel], i: batch tiles, k: IN reduction tiles, innermost).
    # NOTE: the lp/lq output blocks are indexed by (j, i) and accumulated across k; this
    # relies on k being the innermost axis so the block stays resident for the whole k
    # sweep. Do not reorder the grid or change the lp/lq index_map without revisiting this.
    j = pl.program_id(0)
    i = pl.program_id(1)
    k = pl.program_id(2)
    nk = pl.num_programs(2)

    def kl_accumulate(w, w_sigma, w_eps):
        # prior: Normal(0, PRIOR_SCALE), constant-folded -> one multiply-add per element
        lp_elem = -(w * w) * _INV_TWO_PRIOR_VAR - _C_PRIOR
        # posterior: Normal(mu, sigma).log_prob(mu + sigma*eps) == -eps^2/2 - log sigma - c
        lq_elem = -0.5 * (w_eps * w_eps) - jnp.log(w_sigma) - _HALF_LOG_2PI
        if (in_f % tk) or (out_f % to):          # static: mask only emitted if padded
            rows = jax.lax.broadcasted_iota(jnp.int32, (tk, to), 0) + k * tk
            cols = jax.lax.broadcasted_iota(jnp.int32, (tk, to), 1) + j * to
            valid = (rows < in_f) & (cols < out_f)
            lp_elem = jnp.where(valid, lp_elem, 0.0)
            lq_elem = jnp.where(valid, lq_elem, 0.0)
        lp_w = jnp.sum(lp_elem, keepdims=True)   # (1, 1)
        lq_w = jnp.sum(lq_elem, keepdims=True)

        @pl.when(k == 0)
        def _():
            # bias contribution of this OUT tile, counted exactly once (i==0, k==0)
            b_rho = b_rho_ref[...]
            b_eps = b_eps_ref[...]
            b_sigma = _softplus(b_rho)
            b = b_mu_ref[...] + b_sigma * b_eps
            lp_b = -(b * b) * _INV_TWO_PRIOR_VAR - _C_PRIOR
            lq_b = -0.5 * (b_eps * b_eps) - jnp.log(b_sigma) - _HALF_LOG_2PI
            if out_f % to:                       # static
                bcols = jax.lax.broadcasted_iota(jnp.int32, (1, to), 1) + j * to
                bvalid = bcols < out_f
                lp_b = jnp.where(bvalid, lp_b, 0.0)
                lq_b = jnp.where(bvalid, lq_b, 0.0)
            lp0 = lp_w + jnp.sum(lp_b, keepdims=True)
            lq0 = lq_w + jnp.sum(lq_b, keepdims=True)
            lp_ref[...] = jnp.broadcast_to(lp0.reshape(1, 1, 1, 1), lp_ref.shape)
            lq_ref[...] = jnp.broadcast_to(lq0.reshape(1, 1, 1, 1), lq_ref.shape)

        @pl.when(k > 0)
        def _():
            lp_ref[...] += lp_w.reshape(1, 1, 1, 1)
            lq_ref[...] += lq_w.reshape(1, 1, 1, 1)

    if cache_w:
        # n_i > 1: reparameterize + KL exactly once per weight element (i == 0 sweep),
        # cache the reparameterized slab in VMEM and reuse it for i > 0.
        w_cache_ref = maybe_cache[0]

        @pl.when(i == 0)
        def _():
            w_sigma = _softplus(w_rho_ref[...])
            w_eps = w_eps_ref[...]
            w_i0 = w_mu_ref[...] + w_sigma * w_eps        # (tk, to), (IN, OUT) layout
            w_cache_ref[k] = w_i0
            kl_accumulate(w_i0, w_sigma, w_eps)

        w = w_cache_ref[k]
    else:
        w_sigma = _softplus(w_rho_ref[...])
        w_eps = w_eps_ref[...]
        w = w_mu_ref[...] + w_sigma * w_eps               # (tk, to), (IN, OUT) layout

        @pl.when(i == 0)
        def _():
            kl_accumulate(w, w_sigma, w_eps)

    # i > 0 blocks of the lp/lq outputs have no KL contribution; zero them once so every
    # output block is well-defined (the wrapper only reads the i == 0 slice anyway).
    @pl.when((i > 0) & (k == 0))
    def _():
        lp_ref[...] = jnp.zeros_like(lp_ref)
        lq_ref[...] = jnp.zeros_like(lq_ref)

    # --- matmul: accumulate straight into the f32 output block (resident across k) -----
    contrib = jnp.dot(x_ref[...], w, preferred_element_type=jnp.float32)

    @pl.when(k == 0)
    def _():
        out_ref[...] = contrib            # overwrite: the output block starts uninitialized

    @pl.when(k > 0)
    def _():
        out_ref[...] += contrib

    @pl.when(k == nk - 1)
    def _():
        b = b_mu_ref[...] + _softplus(b_rho_ref[...]) * b_eps_ref[...]   # (1, to)
        out_ref[...] += b


@jax.jit
def bbb_linear(x, w_mu_t, w_rho_t, w_eps_t, b_mu, b_rho, b_eps):
    """out = x @ w.T + b (torch semantics), plus log_prior / log_post sums, in one kernel.

    Weight-shaped parameters (w_mu_t, w_rho_t, w_eps_t) are expected in (IN, OUT) layout
    (store them persistently that way; no per-call transpose / extra HBM pass).
    """
    x = x.astype(jnp.float32)
    n, in_f = x.shape
    in_f2, out_f = w_mu_t.shape
    assert in_f == in_f2, "w_mu_t must be (IN, OUT)"

    w_mu_t = w_mu_t.astype(jnp.float32)
    w_rho_t = w_rho_t.astype(jnp.float32)
    w_eps_t = w_eps_t.astype(jnp.float32)
    b_mu2 = b_mu.astype(jnp.float32).reshape(1, out_f)
    b_rho2 = b_rho.astype(jnp.float32).reshape(1, out_f)
    b_eps2 = b_eps.astype(jnp.float32).reshape(1, out_f)

    # Pad to TPU-friendly shapes (sublane multiple of 8, lane multiple of 128), but only
    # when actually needed (static decision -> no extra HBM passes for aligned shapes).
    n_p = _round_up(n, 8)
    in_p = _round_up(in_f, 128)
    out_p = _round_up(out_f, 128)

    if (n_p, in_p) != (n, in_f):
        x = jnp.pad(x, ((0, n_p - n), (0, in_p - in_f)))
    if (in_p, out_p) != (in_f, out_f):
        pad_w = ((0, in_p - in_f), (0, out_p - out_f))
        w_mu_t = jnp.pad(w_mu_t, pad_w)
        w_rho_t = jnp.pad(w_rho_t, pad_w)
        w_eps_t = jnp.pad(w_eps_t, pad_w)
    if out_p != out_f:
        pad_b = ((0, 0), (0, out_p - out_f))
        b_mu2 = jnp.pad(b_mu2, pad_b)
        b_rho2 = jnp.pad(b_rho2, pad_b)
        b_eps2 = jnp.pad(b_eps2, pad_b)

    tb, tk, to, vmem_limit, cache_w = _select_tiling(n_p, in_p, out_p)
    n_j, n_i, n_k = out_p // to, n_p // tb, in_p // tk

    kernel = functools.partial(_bbb_kernel, in_f=in_f, out_f=out_f,
                               tk=tk, to=to, cache_w=cache_w)

    scratch = [pltpu.VMEM((n_k, tk, to), jnp.float32)] if cache_w else []

    # With the weight cache the batch axis must stay "arbitrary" (the i == 0 sweep fills
    # the per-core cache used by i > 0); otherwise both independent axes are "parallel"
    # so v7x megacore can shard (j, i) even when out_f fits in one OUT tile.
    dims = ("parallel", "arbitrary" if cache_w else "parallel", "arbitrary")

    out_pad, lp_part, lq_part = pl.pallas_call(
        kernel,
        out_shape=(
            jax.ShapeDtypeStruct((n_p, out_p), jnp.float32),
            jax.ShapeDtypeStruct((n_j, n_i, 8, 128), jnp.float32),  # per-(j,i) log-prior partial
            jax.ShapeDtypeStruct((n_j, n_i, 8, 128), jnp.float32),  # per-(j,i) log-post  partial
        ),
        grid_spec=pltpu.PrefetchScalarGridSpec(
            num_scalar_prefetch=0,
            grid=(n_j, n_i, n_k),
            in_specs=[
                pl.BlockSpec((tb, tk), lambda j, i, k: (i, k)),      # x
                pl.BlockSpec((tk, to), lambda j, i, k: (k, j)),      # w_mu  (IN, OUT)
                pl.BlockSpec((tk, to), lambda j, i, k: (k, j)),      # w_rho (IN, OUT)
                pl.BlockSpec((tk, to), lambda j, i, k: (k, j)),      # w_eps (IN, OUT)
                pl.BlockSpec((1, to), lambda j, i, k: (0, j)),       # b_mu  (resident over i,k)
                pl.BlockSpec((1, to), lambda j, i, k: (0, j)),       # b_rho
                pl.BlockSpec((1, to), lambda j, i, k: (0, j)),       # b_eps
            ],
            out_specs=[
                pl.BlockSpec((tb, to), lambda j, i, k: (i, j)),            # out (resident over k)
                pl.BlockSpec((1, 1, 8, 128), lambda j, i, k: (j, i, 0, 0)),  # log-prior partial
                pl.BlockSpec((1, 1, 8, 128), lambda j, i, k: (j, i, 0, 0)),  # log-post  partial
            ],
            scratch_shapes=scratch,
        ),
        compiler_params=pltpu.CompilerParams(
            dimension_semantics=dims,
            vmem_limit_bytes=vmem_limit,
        ),
    )(x, w_mu_t, w_rho_t, w_eps_t, b_mu2, b_rho2, b_eps2)

    out = out_pad[:n, :out_f]
    log_prior = jnp.sum(lp_part[:, 0, 0, 0])   # only the i == 0 blocks carry KL values
    log_post = jnp.sum(lq_part[:, 0, 0, 0])
    return out, log_prior, log_post


def reference(x, w_mu, w_rho, w_eps, b_mu, b_rho, b_eps):
    """Plain-JAX port of the torch forward (torch-faithful formulas, (OUT, IN) layout)."""
    def normal_logpdf(v, mu, scale):
        return -((v - mu) ** 2) / (2.0 * scale * scale) - jnp.log(scale) - _HALF_LOG_2PI
    w_sigma = jnp.log1p(jnp.exp(w_rho))
    b_sigma = jnp.log1p(jnp.exp(b_rho))
    w = w_mu + w_sigma * w_eps
    b = b_mu + b_sigma * b_eps
    log_prior = (jnp.sum(normal_logpdf(w, 0.0, PRIOR_SCALE)) +
                 jnp.sum(normal_logpdf(b, 0.0, PRIOR_SCALE)))
    log_post = (jnp.sum(normal_logpdf(w, w_mu, w_sigma)) +
                jnp.sum(normal_logpdf(b, b_mu, b_sigma)))
    out = x @ w.T + b
    return out, log_prior, log_post


if __name__ == "__main__":
    # Small shapes consistent with Linear_BBB(input_features=32, output_features=16)
    batch, in_f, out_f = 8, 32, 16

    key = jax.random.PRNGKey(0)
    k_x, k_wmu, k_bmu, k_weps, k_beps = jax.random.split(key, 5)

    x = jax.random.normal(k_x, (batch, in_f), dtype=jnp.float32)

    # Parameters in torch layout (out, in) — used by the reference.
    w_mu = jax.random.uniform(k_wmu, (out_f, in_f), jnp.float32, -0.6, 0.6)
    w_rho = jnp.full((out_f, in_f), -6.0, dtype=jnp.float32)   # uniform_(-6,-6) == constant -6
    b_mu = jax.random.uniform(k_bmu, (out_f,), jnp.float32, -0.6, 0.6)
    b_rho = jnp.full((out_f,), -6.0, dtype=jnp.float32)

    # Epsilons ~ Normal(0,1) drawn in the forward pass (glue, deterministic here)
    w_eps = jax.random.normal(k_weps, (out_f, in_f), dtype=jnp.float32)
    b_eps = jax.random.normal(k_beps, (out_f,), dtype=jnp.float32)

    # Kernel-side persistent storage layout: (IN, OUT).  One-time conversion, outside jit.
    w_mu_t = jnp.asarray(w_mu.T)
    w_rho_t = jnp.asarray(w_rho.T)
    w_eps_t = jnp.asarray(w_eps.T)

    out, log_prior, log_post = bbb_linear(x, w_mu_t, w_rho_t, w_eps_t, b_mu, b_rho, b_eps)
    jax.block_until_ready((out, log_prior, log_post))

    ref_out, ref_lp, ref_lq = reference(x, w_mu, w_rho, w_eps, b_mu, b_rho, b_eps)
    assert jnp.allclose(out, ref_out, atol=1e-4, rtol=1e-4), "output mismatch"
    assert jnp.allclose(log_prior, ref_lp, rtol=1e-4, atol=1e-2), "log_prior mismatch"
    # reference uses the (w-mu)^2 form which suffers f32 cancellation; kernel uses exact eps^2/2
    assert jnp.allclose(log_post, ref_lq, rtol=2e-4, atol=5e-2), "log_post mismatch"

    print("KERNEL_OK")
</pallas_src>

<mosaic_0001>
module attributes {stable_mosaic.version = 11 : i64} {
  func.func @_bbb_kernel(%arg0: i32, %arg1: i32, %arg2: i32, %arg3: memref<8x128xf32, #tpu.memory_space<vmem>>, %arg4: memref<128x128xf32, #tpu.memory_space<vmem>>, %arg5: memref<128x128xf32, #tpu.memory_space<vmem>>, %arg6: memref<128x128xf32, #tpu.memory_space<vmem>>, %arg7: memref<1x128xf32, #tpu.memory_space<vmem>>, %arg8: memref<1x128xf32, #tpu.memory_space<vmem>>, %arg9: memref<1x128xf32, #tpu.memory_space<vmem>>, %arg10: memref<8x128xf32, #tpu.memory_space<vmem>>, %arg11: memref<1x1x8x128xf32, #tpu.memory_space<vmem>>, %arg12: memref<1x1x8x128xf32, #tpu.memory_space<vmem>>) attributes {dimension_semantics = [#tpu.dimension_semantics<parallel>, #tpu.dimension_semantics<parallel>, #tpu.dimension_semantics<arbitrary>], iteration_bounds = array<i64: 1, 1, 1>, scalar_prefetch = 0 : i64, scratch_operands = 0 : i64, tpu.core_type = #tpu.core_type<tc>, window_params = [{transform_indices = @transform_0, window_bounds = array<i64: 8, 128>}, {transform_indices = @transform_1, window_bounds = array<i64: 128, 128>}, {transform_indices = @transform_2, window_bounds = array<i64: 128, 128>}, {transform_indices = @transform_3, window_bounds = array<i64: 128, 128>}, {transform_indices = @transform_4, window_bounds = array<i64: 1, 128>}, {transform_indices = @transform_5, window_bounds = array<i64: 1, 128>}, {transform_indices = @transform_6, window_bounds = array<i64: 1, 128>}, {transform_indices = @transform_7, window_bounds = array<i64: 8, 128>}, {transform_indices = @transform_8, window_bounds = array<i64: 1, 1, 8, 128>}, {transform_indices = @transform_9, window_bounds = array<i64: 1, 1, 8, 128>}]} {
    %c0 = arith.constant 0 : index
    %c0_0 = arith.constant 0 : index
    %0 = vector.load %arg5[%c0, %c0_0] : memref<128x128xf32, #tpu.memory_space<vmem>>, vector<128x128xf32>
    %cst = arith.constant 2.000000e+01 : f32
    %1 = vector.broadcast %cst : f32 to vector<128x128xf32>
    %2 = arith.cmpf ogt, %0, %1 : vector<128x128xf32>
    %cst_1 = arith.constant 2.000000e+01 : f32
    %3 = vector.broadcast %cst_1 : f32 to vector<128x128xf32>
    %4 = arith.minimumf %0, %3 : vector<128x128xf32>
    %5 = math.exp %4 : vector<128x128xf32>
    %6 = math.log1p %5 : vector<128x128xf32>
    %7 = arith.select %2, %0, %6 : vector<128x128xi1>, vector<128x128xf32>
    %c0_2 = arith.constant 0 : index
    %c0_3 = arith.constant 0 : index
    %8 = vector.load %arg6[%c0_2, %c0_3] : memref<128x128xf32, #tpu.memory_space<vmem>>, vector<128x128xf32>
    %c0_4 = arith.constant 0 : index
    %c0_5 = arith.constant 0 : index
    %9 = vector.load %arg4[%c0_4, %c0_5] : memref<128x128xf32, #tpu.memory_space<vmem>>, vector<128x128xf32>
    %10 = arith.mulf %7, %8 : vector<128x128xf32>
    %11 = arith.addf %9, %10 : vector<128x128xf32>
    %c0_i32 = arith.constant 0 : i32
    %12 = arith.cmpi eq, %arg1, %c0_i32 : i32
    %13 = arith.extui %12 : i1 to i32
    %c0_i32_6 = arith.constant 0 : i32
    %14 = arith.cmpi ne, %13, %c0_i32_6 : i32
    scf.if %14 {
      %31 = arith.mulf %11, %11 : vector<128x128xf32>
      %cst_19 = arith.constant 0.000000e+00 : f32
      %32 = vector.broadcast %cst_19 : f32 to vector<128x128xf32>
      %33 = arith.subf %32, %31 : vector<128x128xf32>
      %cst_20 = arith.constant 0.013888889 : f32
      %34 = vector.broadcast %cst_20 : f32 to vector<128x128xf32>
      %35 = arith.mulf %33, %34 : vector<128x128xf32>
      %cst_21 = arith.constant 2.71069789 : f32
      %36 = vector.broadcast %cst_21 : f32 to vector<128x128xf32>
      %37 = arith.subf %35, %36 : vector<128x128xf32>
      %38 = arith.mulf %8, %8 : vector<128x128xf32>
      %cst_22 = arith.constant -5.000000e-01 : f32
      %39 = vector.broadcast %cst_22 : f32 to vector<128x128xf32>
      %40 = arith.mulf %39, %38 : vector<128x128xf32>
      %41 = math.log %7 : vector<128x128xf32>
      %42 = arith.subf %40, %41 : vector<128x128xf32>
      %cst_23 = arith.constant 0.918938517 : f32
      %43 = vector.broadcast %cst_23 : f32 to vector<128x128xf32>
      %44 = arith.subf %42, %43 : vector<128x128xf32>
      %45 = tpu.iota {dimensions = array<i32: 0>} : vector<128x128xi32>
      %c128_i32 = arith.constant 128 : i32
      %46 = arith.muli %arg2, %c128_i32 : i32
      %47 = vector.broadcast %46 : i32 to vector<128x128xi32>
      %48 = arith.addi %45, %47 : vector<128x128xi32>
      %49 = tpu.iota {dimensions = array<i32: 1>} : vector<128x128xi32>
      %c128_i32_24 = arith.constant 128 : i32
      %50 = arith.muli %arg0, %c128_i32_24 : i32
      %51 = vector.broadcast %50 : i32 to vector<128x128xi32>
      %52 = arith.addi %49, %51 : vector<128x128xi32>
      %c32_i32 = arith.constant 32 : i32
      %53 = vector.broadcast %c32_i32 : i32 to vector<128x128xi32>
      %54 = arith.cmpi slt, %48, %53 : vector<128x128xi32>
      %c16_i32 = arith.constant 16 : i32
      %55 = vector.broadcast %c16_i32 : i32 to vector<128x128xi32>
      %56 = arith.cmpi slt, %52, %55 : vector<128x128xi32>
      %57 = arith.andi %54, %56 : vector<128x128xi1>
      %cst_25 = arith.constant 0.000000e+00 : f32
      %58 = vector.broadcast %cst_25 : f32 to vector<128x128xf32>
      %59 = arith.select %57, %37, %58 : vector<128x128xi1>, vector<128x128xf32>
      %cst_26 = arith.constant 0.000000e+00 : f32
      %60 = vector.broadcast %cst_26 : f32 to vector<128x128xf32>
      %61 = arith.select %57, %44, %60 : vector<128x128xi1>, vector<128x128xf32>
      %62 = vector.shape_cast %59 : vector<128x128xf32> to vector<1x128x128xf32>
      %cst_27 = arith.constant dense<0.000000e+00> : vector<1xf32>
      %63 = vector.multi_reduction <add>, %62, %cst_27 [1, 2] : vector<1x128x128xf32> to vector<1xf32>
      %64 = vector.shape_cast %63 : vector<1xf32> to vector<1x1x1xf32>
      %65 = vector.extract %64[0, 0, 0] : f32 from vector<1x1x1xf32>
      %66 = vector.broadcast %65 : f32 to vector<1x1xf32>
      %67 = vector.shape_cast %61 : vector<128x128xf32> to vector<1x128x128xf32>
      %cst_28 = arith.constant dense<0.000000e+00> : vector<1xf32>
      %68 = vector.multi_reduction <add>, %67, %cst_28 [1, 2] : vector<1x128x128xf32> to vector<1xf32>
      %69 = vector.shape_cast %68 : vector<1xf32> to vector<1x1x1xf32>
      %70 = vector.extract %69[0, 0, 0] : f32 from vector<1x1x1xf32>
      %71 = vector.broadcast %70 : f32 to vector<1x1xf32>
      %c0_i32_29 = arith.constant 0 : i32
      %72 = arith.cmpi eq, %arg2, %c0_i32_29 : i32
      %73 = arith.extui %72 : i1 to i32
      %c0_i32_30 = arith.constant 0 : i32
      %74 = arith.cmpi ne, %73, %c0_i32_30 : i32
      scf.if %74 {
        %c0_33 = arith.constant 0 : index
        %c0_34 = arith.constant 0 : index
        %78 = vector.load %arg8[%c0_33, %c0_34] : memref<1x128xf32, #tpu.memory_space<vmem>>, vector<1x128xf32>
        %c0_35 = arith.constant 0 : index
        %c0_36 = arith.constant 0 : index
        %79 = vector.load %arg9[%c0_35, %c0_36] : memref<1x128xf32, #tpu.memory_space<vmem>>, vector<1x128xf32>
        %cst_37 = arith.constant 2.000000e+01 : f32
        %80 = vector.broadcast %cst_37 : f32 to vector<1x128xf32>
        %81 = arith.cmpf ogt, %78, %80 : vector<1x128xf32>
        %cst_38 = arith.constant 2.000000e+01 : f32
        %82 = vector.broadcast %cst_38 : f32 to vector<1x128xf32>
        %83 = arith.minimumf %78, %82 : vector<1x128xf32>
        %84 = math.exp %83 : vector<1x128xf32>
        %85 = math.log1p %84 : vector<1x128xf32>
        %86 = arith.select %81, %78, %85 : vector<1x128xi1>, vector<1x128xf32>
        %c0_39 = arith.constant 0 : index
        %c0_40 = arith.constant 0 : index
        %87 = vector.load %arg7[%c0_39, %c0_40] : memref<1x128xf32, #tpu.memory_space<vmem>>, vector<1x128xf32>
        %88 = arith.mulf %86, %79 : vector<1x128xf32>
        %89 = arith.addf %87, %88 : vector<1x128xf32>
        %90 = arith.mulf %89, %89 : vector<1x128xf32>
        %cst_41 = arith.constant 0.000000e+00 : f32
        %91 = vector.broadcast %cst_41 : f32 to vector<1x128xf32>
        %92 = arith.subf %91, %90 : vector<1x128xf32>
        %cst_42 = arith.constant 0.013888889 : f32
        %93 = vector.broadcast %cst_42 : f32 to vector<1x128xf32>
        %94 = arith.mulf %92, %93 : vector<1x128xf32>
        %cst_43 = arith.constant 2.71069789 : f32
        %95 = vector.broadcast %cst_43 : f32 to vector<1x128xf32>
        %96 = arith.subf %94, %95 : vector<1x128xf32>
        %97 = arith.mulf %79, %79 : vector<1x128xf32>
        %cst_44 = arith.constant -5.000000e-01 : f32
        %98 = vector.broadcast %cst_44 : f32 to vector<1x128xf32>
        %99 = arith.mulf %98, %97 : vector<1x128xf32>
        %100 = math.log %86 : vector<1x128xf32>
        %101 = arith.subf %99, %100 : vector<1x128xf32>
        %cst_45 = arith.constant 0.918938517 : f32
        %102 = vector.broadcast %cst_45 : f32 to vector<1x128xf32>
        %103 = arith.subf %101, %102 : vector<1x128xf32>
        %104 = tpu.iota {dimensions = array<i32: 1>} : vector<1x128xi32>
        %c128_i32_46 = arith.constant 128 : i32
        %105 = arith.muli %arg0, %c128_i32_46 : i32
        %106 = vector.broadcast %105 : i32 to vector<1x128xi32>
        %107 = arith.addi %104, %106 : vector<1x128xi32>
        %c16_i32_47 = arith.constant 16 : i32
        %108 = vector.broadcast %c16_i32_47 : i32 to vector<1x128xi32>
        %109 = arith.cmpi slt, %107, %108 : vector<1x128xi32>
        %cst_48 = arith.constant 0.000000e+00 : f32
        %110 = vector.broadcast %cst_48 : f32 to vector<1x128xf32>
        %111 = arith.select %109, %96, %110 : vector<1x128xi1>, vector<1x128xf32>
        %cst_49 = arith.constant 0.000000e+00 : f32
        %112 = vector.broadcast %cst_49 : f32 to vector<1x128xf32>
        %113 = arith.select %109, %103, %112 : vector<1x128xi1>, vector<1x128xf32>
        %114 = vector.shape_cast %111 : vector<1x128xf32> to vector<1x1x128xf32>
        %cst_50 = arith.constant dense<0.000000e+00> : vector<1xf32>
        %115 = vector.multi_reduction <add>, %114, %cst_50 [1, 2] : vector<1x1x128xf32> to vector<1xf32>
        %116 = vector.shape_cast %115 : vector<1xf32> to vector<1x1x1xf32>
        %117 = vector.extract %116[0, 0, 0] : f32 from vector<1x1x1xf32>
        %118 = vector.broadcast %117 : f32 to vector<1x1xf32>
        %119 = arith.addf %66, %118 : vector<1x1xf32>
        %120 = vector.shape_cast %113 : vector<1x128xf32> to vector<1x1x128xf32>
        %cst_51 = arith.constant dense<0.000000e+00> : vector<1xf32>
        %121 = vector.multi_reduction <add>, %120, %cst_51 [1, 2] : vector<1x1x128xf32> to vector<1xf32>
        %122 = vector.shape_cast %121 : vector<1xf32> to vector<1x1x1xf32>
        %123 = vector.extract %122[0, 0, 0] : f32 from vector<1x1x1xf32>
        %124 = vector.broadcast %123 : f32 to vector<1x1xf32>
        %125 = arith.addf %71, %124 : vector<1x1xf32>
        %126 = vector.shape_cast %119 : vector<1x1xf32> to vector<1x1x1x1xf32>
        %127 = vector.shape_cast %126 : vector<1x1x1x1xf32> to vector<1x1x1x1xf32>
        %128 = vector.broadcast %127 : vector<1x1x1x1xf32> to vector<1x1x8x128xf32>
        %c0_52 = arith.constant 0 : index
        %c0_53 = arith.constant 0 : index
        %c0_54 = arith.constant 0 : index
        %c0_55 = arith.constant 0 : index
        %129 = vector.load %arg11[%c0_52, %c0_53, %c0_54, %c0_55] : memref<1x1x8x128xf32, #tpu.memory_space<vmem>>, vector<1x1x8x128xf32>
        tpu.vector_store %arg11[%c0_52, %c0_53, %c0_54, %c0_55], %128 {strides = array<i32>} : memref<1x1x8x128xf32, #tpu.memory_space<vmem>>, vector<1x1x8x128xf32>,
        %130 = vector.shape_cast %125 : vector<1x1xf32> to vector<1x1x1x1xf32>
        %131 = vector.shape_cast %130 : vector<1x1x1x1xf32> to vector<1x1x1x1xf32>
        %132 = vector.broadcast %131 : vector<1x1x1x1xf32> to vector<1x1x8x128xf32>
        %c0_56 = arith.constant 0 : index
        %c0_57 = arith.constant 0 : index
        %c0_58 = arith.constant 0 : index
        %c0_59 = arith.constant 0 : index
        %133 = vector.load %arg12[%c0_56, %c0_57, %c0_58, %c0_59] : memref<1x1x8x128xf32, #tpu.memory_space<vmem>>, vector<1x1x8x128xf32>
        tpu.vector_store %arg12[%c0_56, %c0_57, %c0_58, %c0_59], %132 {strides = array<i32>} : memref<1x1x8x128xf32, #tpu.memory_space<vmem>>, vector<1x1x8x128xf32>,
      } else {
      }
      %c0_i32_31 = arith.constant 0 : i32
      %75 = arith.cmpi sgt, %arg2, %c0_i32_31 : i32
      %76 = arith.extui %75 : i1 to i32
      %c0_i32_32 = arith.constant 0 : i32
      %77 = arith.cmpi ne, %76, %c0_i32_32 : i32
      scf.if %77 {
        %c0_33 = arith.constant 0 : index
        %c0_34 = arith.constant 0 : index
        %c0_35 = arith.constant 0 : index
        %c0_36 = arith.constant 0 : index
        %78 = vector.load %arg11[%c0_33, %c0_34, %c0_35, %c0_36] : memref<1x1x8x128xf32, #tpu.memory_space<vmem>>, vector<1x1x8x128xf32>
        %79 = vector.shape_cast %66 : vector<1x1xf32> to vector<1x1x1x1xf32>
        %80 = vector.broadcast %79 : vector<1x1x1x1xf32> to vector<1x1x8x128xf32>
        %81 = arith.addf %78, %80 : vector<1x1x8x128xf32>
        %c0_37 = arith.constant 0 : index
        %c0_38 = arith.constant 0 : index
        %c0_39 = arith.constant 0 : index
        %c0_40 = arith.constant 0 : index
        %82 = vector.load %arg11[%c0_37, %c0_38, %c0_39, %c0_40] : memref<1x1x8x128xf32, #tpu.memory_space<vmem>>, vector<1x1x8x128xf32>
        tpu.vector_store %arg11[%c0_37, %c0_38, %c0_39, %c0_40], %81 {strides = array<i32>} : memref<1x1x8x128xf32, #tpu.memory_space<vmem>>, vector<1x1x8x128xf32>,
        %c0_41 = arith.constant 0 : index
        %c0_42 = arith.constant 0 : index
        %c0_43 = arith.constant 0 : index
        %c0_44 = arith.constant 0 : index
        %83 = vector.load %arg12[%c0_41, %c0_42, %c0_43, %c0_44] : memref<1x1x8x128xf32, #tpu.memory_space<vmem>>, vector<1x1x8x128xf32>
        %84 = vector.shape_cast %71 : vector<1x1xf32> to vector<1x1x1x1xf32>
        %85 = vector.broadcast %84 : vector<1x1x1x1xf32> to vector<1x1x8x128xf32>
        %86 = arith.addf %83, %85 : vector<1x1x8x128xf32>
        %c0_45 = arith.constant 0 : index
        %c0_46 = arith.constant 0 : index
        %c0_47 = arith.constant 0 : index
        %c0_48 = arith.constant 0 : index
        %87 = vector.load %arg12[%c0_45, %c0_46, %c0_47, %c0_48] : memref<1x1x8x128xf32, #tpu.memory_space<vmem>>, vector<1x1x8x128xf32>
        tpu.vector_store %arg12[%c0_45, %c0_46, %c0_47, %c0_48], %86 {strides = array<i32>} : memref<1x1x8x128xf32, #tpu.memory_space<vmem>>, vector<1x1x8x128xf32>,
      } else {
      }
    } else {
    }
    %c0_i32_7 = arith.constant 0 : i32
    %15 = arith.cmpi sgt, %arg1, %c0_i32_7 : i32
    %c0_i32_8 = arith.constant 0 : i32
    %16 = arith.cmpi eq, %arg2, %c0_i32_8 : i32
    %17 = arith.andi %15, %16 : i1
    %18 = arith.extui %17 : i1 to i32
    %c0_i32_9 = arith.constant 0 : i32
    %19 = arith.cmpi ne, %18, %c0_i32_9 : i32
    scf.if %19 {
      %cst_19 = arith.constant 0.000000e+00 : f32
      %31 = vector.broadcast %cst_19 : f32 to vector<1x1x8x128xf32>
      %c0_20 = arith.constant 0 : index
      %c0_21 = arith.constant 0 : index
      %c0_22 = arith.constant 0 : index
      %c0_23 = arith.constant 0 : index
      %32 = vector.load %arg11[%c0_20, %c0_21, %c0_22, %c0_23] : memref<1x1x8x128xf32, #tpu.memory_space<vmem>>, vector<1x1x8x128xf32>
      tpu.vector_store %arg11[%c0_20, %c0_21, %c0_22, %c0_23], %31 {strides = array<i32>} : memref<1x1x8x128xf32, #tpu.memory_space<vmem>>, vector<1x1x8x128xf32>,
      %cst_24 = arith.constant 0.000000e+00 : f32
      %33 = vector.broadcast %cst_24 : f32 to vector<1x1x8x128xf32>
      %c0_25 = arith.constant 0 : index
      %c0_26 = arith.constant 0 : index
      %c0_27 = arith.constant 0 : index
      %c0_28 = arith.constant 0 : index
      %34 = vector.load %arg12[%c0_25, %c0_26, %c0_27, %c0_28] : memref<1x1x8x128xf32, #tpu.memory_space<vmem>>, vector<1x1x8x128xf32>
      tpu.vector_store %arg12[%c0_25, %c0_26, %c0_27, %c0_28], %33 {strides = array<i32>} : memref<1x1x8x128xf32, #tpu.memory_space<vmem>>, vector<1x1x8x128xf32>,
    } else {
    }
    %c0_10 = arith.constant 0 : index
    %c0_11 = arith.constant 0 : index
    %20 = vector.load %arg3[%c0_10, %c0_11] : memref<8x128xf32, #tpu.memory_space<vmem>>, vector<8x128xf32>
    %cst_12 = arith.constant dense<0.000000e+00> : vector<8x128xf32>
    %21 = tpu.matmul %20, %11, %cst_12 {dimension_numbers = #tpu.dot_dimension_numbers<[1], [0], [0], [1], [0, 0, 1, 1], [], []>} : vector<8x128xf32>, vector<128x128xf32>, vector<8x128xf32> -> vector<8x128xf32>
    %c0_i32_13 = arith.constant 0 : i32
    %22 = arith.cmpi eq, %arg2, %c0_i32_13 : i32
    %23 = arith.extui %22 : i1 to i32
    %c0_i32_14 = arith.constant 0 : i32
    %24 = arith.cmpi ne, %23, %c0_i32_14 : i32
    scf.if %24 {
      %c0_19 = arith.constant 0 : index
      %c0_20 = arith.constant 0 : index
      %31 = vector.load %arg10[%c0_19, %c0_20] : memref<8x128xf32, #tpu.memory_space<vmem>>, vector<8x128xf32>
      tpu.vector_store %arg10[%c0_19, %c0_20], %21 {strides = array<i32>} : memref<8x128xf32, #tpu.memory_space<vmem>>, vector<8x128xf32>,
    } else {
    }
    %c0_i32_15 = arith.constant 0 : i32
    %25 = arith.cmpi sgt, %arg2, %c0_i32_15 : i32
    %26 = arith.extui %25 : i1 to i32
    %c0_i32_16 = arith.constant 0 : i32
    %27 = arith.cmpi ne, %26, %c0_i32_16 : i32
    scf.if %27 {
      %c0_19 = arith.constant 0 : index
      %c0_20 = arith.constant 0 : index
      %31 = vector.load %arg10[%c0_19, %c0_20] : memref<8x128xf32, #tpu.memory_space<vmem>>, vector<8x128xf32>
      %32 = arith.addf %31, %21 : vector<8x128xf32>
      %c0_21 = arith.constant 0 : index
      %c0_22 = arith.constant 0 : index
      %33 = vector.load %arg10[%c0_21, %c0_22] : memref<8x128xf32, #tpu.memory_space<vmem>>, vector<8x128xf32>
      tpu.vector_store %arg10[%c0_21, %c0_22], %32 {strides = array<i32>} : memref<8x128xf32, #tpu.memory_space<vmem>>, vector<8x128xf32>,
    } else {
    }
    %c0_i32_17 = arith.constant 0 : i32
    %28 = arith.cmpi eq, %arg2, %c0_i32_17 : i32
    %29 = arith.extui %28 : i1 to i32
    %c0_i32_18 = arith.constant 0 : i32
    %30 = arith.cmpi ne, %29, %c0_i32_18 : i32
    scf.if %30 {
      %c0_19 = arith.constant 0 : index
      %c0_20 = arith.constant 0 : index
      %31 = vector.load %arg7[%c0_19, %c0_20] : memref<1x128xf32, #tpu.memory_space<vmem>>, vector<1x128xf32>
      %c0_21 = arith.constant 0 : index
      %c0_22 = arith.constant 0 : index
      %32 = vector.load %arg8[%c0_21, %c0_22] : memref<1x128xf32, #tpu.memory_space<vmem>>, vector<1x128xf32>
      %cst_23 = arith.constant 2.000000e+01 : f32
      %33 = vector.broadcast %cst_23 : f32 to vector<1x128xf32>
      %34 = arith.cmpf ogt, %32, %33 : vector<1x128xf32>
      %cst_24 = arith.constant 2.000000e+01 : f32
      %35 = vector.broadcast %cst_24 : f32 to vector<1x128xf32>
      %36 = arith.minimumf %32, %35 : vector<1x128xf32>
      %37 = math.exp %36 : vector<1x128xf32>
      %38 = math.log1p %37 : vector<1x128xf32>
      %39 = arith.select %34, %32, %38 : vector<1x128xi1>, vector<1x128xf32>
      %c0_25 = arith.constant 0 : index
      %c0_26 = arith.constant 0 : index
      %40 = vector.load %arg9[%c0_25, %c0_26] : memref<1x128xf32, #tpu.memory_space<vmem>>, vector<1x128xf32>
      %41 = arith.mulf %39, %40 : vector<1x128xf32>
      %42 = arith.addf %31, %41 : vector<1x128xf32>
      %c0_27 = arith.constant 0 : index
      %c0_28 = arith.constant 0 : index
      %43 = vector.load %arg10[%c0_27, %c0_28] : memref<8x128xf32, #tpu.memory_space<vmem>>, vector<8x128xf32>
      %44 = vector.broadcast %42 : vector<1x128xf32> to vector<8x128xf32>
      %45 = arith.addf %43, %44 : vector<8x128xf32>
      %c0_29 = arith.constant 0 : index
      %c0_30 = arith.constant 0 : index
      %46 = vector.load %arg10[%c0_29, %c0_30] : memref<8x128xf32, #tpu.memory_space<vmem>>, vector<8x128xf32>
      tpu.vector_store %arg10[%c0_29, %c0_30], %45 {strides = array<i32>} : memref<8x128xf32, #tpu.memory_space<vmem>>, vector<8x128xf32>,
    } else {
    }
    return
  }
  func.func @transform_0(%arg0: i32, %arg1: i32, %arg2: i32) -> (i32, i32) {
    %c0_i32 = arith.constant 0 : i32
    return %arg1, %arg2 : i32, i32
  }
  func.func @transform_1(%arg0: i32, %arg1: i32, %arg2: i32) -> (i32, i32) {
    %c0_i32 = arith.constant 0 : i32
    return %arg2, %arg0 : i32, i32
  }
  func.func @transform_2(%arg0: i32, %arg1: i32, %arg2: i32) -> (i32, i32) {
    %c0_i32 = arith.constant 0 : i32
    return %arg2, %arg0 : i32, i32
  }
  func.func @transform_3(%arg0: i32, %arg1: i32, %arg2: i32) -> (i32, i32) {
    %c0_i32 = arith.constant 0 : i32
    return %arg2, %arg0 : i32, i32
  }
  func.func @transform_4(%arg0: i32, %arg1: i32, %arg2: i32) -> (i32, i32) {
    %c0_i32 = arith.constant 0 : i32
    %c0_i32_0 = arith.constant 0 : i32
    return %c0_i32, %arg0 : i32, i32
  }
  func.func @transform_5(%arg0: i32, %arg1: i32, %arg2: i32) -> (i32, i32) {
    %c0_i32 = arith.constant 0 : i32
    %c0_i32_0 = arith.constant 0 : i32
    return %c0_i32, %arg0 : i32, i32
  }
  func.func @transform_6(%arg0: i32, %arg1: i32, %arg2: i32) -> (i32, i32) {
    %c0_i32 = arith.constant 0 : i32
    %c0_i32_0 = arith.constant 0 : i32
    return %c0_i32, %arg0 : i32, i32
  }
  func.func @transform_7(%arg0: i32, %arg1: i32, %arg2: i32) -> (i32, i32) {
    %c0_i32 = arith.constant 0 : i32
    return %arg1, %arg0 : i32, i32
  }
  func.func @transform_8(%arg0: i32, %arg1: i32, %arg2: i32) -> (i32, i32, i32, i32) {
    %c0_i32 = arith.constant 0 : i32
    %c0_i32_0 = arith.constant 0 : i32
    %c0_i32_1 = arith.constant 0 : i32
    return %arg0, %arg1, %c0_i32, %c0_i32_0 : i32, i32, i32, i32
  }
  func.func @transform_9(%arg0: i32, %arg1: i32, %arg2: i32) -> (i32, i32, i32, i32) {
    %c0_i32 = arith.constant 0 : i32
    %c0_i32_0 = arith.constant 0 : i32
    %c0_i32_1 = arith.constant 0 : i32
    return %arg0, %arg1, %c0_i32, %c0_i32_0 : i32, i32, i32, i32
  }
}

</mosaic_0001>

<llo_original>
// kernel: bbb_linear.1
$region0: #{bbb_linear.1}
  #allocation0 [shape = 'u32[]', space=smem, size = 0x4, offset = 0x4, fixed_abs, tag = 'smem constant byte address 0x4 - core index']
  #allocation1 [shape = 'u32[144,128]{1,0:T(1,128)}', space=vmem, size = 0x12000, scoped, tag = 'internal scratch']
  %s0 = inlined_call_operand.vmem [shape: f32[8,128], index: 0, kind: input, shape index: {}]
  %s1 = inlined_call_operand.vmem [shape: f32[128,128], index: 1, kind: input, shape index: {}]
  %s2 = inlined_call_operand.vmem [shape: f32[128,128], index: 2, kind: input, shape index: {}]
  %s3 = inlined_call_operand.vmem [shape: f32[128,128], index: 3, kind: input, shape index: {}]
  %s4 = inlined_call_operand.vmem [shape: f32[1,128], index: 4, kind: input, shape index: {}]
  %s5 = inlined_call_operand.vmem [shape: f32[1,128], index: 5, kind: input, shape index: {}]
  %s6 = inlined_call_operand.vmem [shape: f32[1,128], index: 6, kind: input, shape index: {}]
  %s7 = inlined_call_operand.hbm [shape: f32[8,128], index: 7, kind: output, shape index: {0}]
  %s8 = inlined_call_operand.vmem [shape: f32[1,1,8,128], index: 8, kind: output, shape index: {1}]
  %s9 = inlined_call_operand.vmem [shape: f32[1,1,8,128], index: 9, kind: output, shape index: {2}]
  %10 = xla_tuple %s7, %s8, %s9
  %s11 = sld [smem:[#allocation0]]
  $region82: #{bbb_linear.1} parent=0
    _
  %s13 = ssub.s32 1, %s11
  %s14 = scalar_select 0, %s13, %s11
  $region1: #{bbb_linear.1} parent=0
    #allocation2 [shape = 'u8[4096]{0}', space=vmem, size = 0x1000, scoped, tag = 'output window, operand 0, single buffered']
    #allocation3 [shape = 's32[1]{0}', space=sflag, size = 0x4, scoped, tag = 'scoped memory for bbb_linear.1']
    %15 = vsyncpa [#allocation3], 0
    // Predicated region
    $region2: #{bbb_linear.1} parent=1 // pred_check
      _
    $region3: #{bbb_linear.1} parent=1 // pred_check_branch
      %17 = sbr.rel (0) target = $region5
    $region4: #{bbb_linear.1} parent=1 // pred_region
      _
    $region5: #{bbb_linear.1} parent=1 // pred_fallthru
      _
    // Predicated region
    $region6: #{bbb_linear.1} parent=1 // pred_check
      _
    $region7: #{bbb_linear.1} parent=1 // pred_check_branch
      %19 = sbr.rel (0) target = $region9
    $region8: #{bbb_linear.1} parent=1 // pred_region
      _
    $region9: #{bbb_linear.1} parent=1 // pred_fallthru
      _
    // Predicated region
    $region10: #{bbb_linear.1} parent=1 // pred_check
      _
    $region11: #{bbb_linear.1} parent=1 // pred_check_branch
      %21 = sbr.rel (0) target = $region13
    $region12: #{bbb_linear.1} parent=1 // pred_region
      _
    $region13: #{bbb_linear.1} parent=1 // pred_fallthru
      _
    // Predicated region
    $region14: #{bbb_linear.1} parent=1 // pred_check
      _
    $region15: #{bbb_linear.1} parent=1 // pred_check_branch
      %23 = sbr.rel (0) target = $region17
    $region16: #{bbb_linear.1} parent=1 // pred_region
      _
    $region17: #{bbb_linear.1} parent=1 // pred_fallthru
      _
    // Predicated region
    $region18: #{bbb_linear.1} parent=1 // pred_check
      _
    $region19: #{bbb_linear.1} parent=1 // pred_check_branch
      %25 = sbr.rel (0) target = $region21
    $region20: #{bbb_linear.1} parent=1 // pred_region
      _
    $region21: #{bbb_linear.1} parent=1 // pred_fallthru
      _
    // Predicated region
    $region22: #{bbb_linear.1} parent=1 // pred_check
      _
    $region23: #{bbb_linear.1} parent=1 // pred_check_branch
      %27 = sbr.rel (0) target = $region25
    $region24: #{bbb_linear.1} parent=1 // pred_region
      _
    $region25: #{bbb_linear.1} parent=1 // pred_fallthru
      _
    // Predicated region
    $region26: #{bbb_linear.1} parent=1 // pred_check
      _
    $region27: #{bbb_linear.1} parent=1 // pred_check_branch
      %29 = sbr.rel (0) target = $region29
    $region28: #{bbb_linear.1} parent=1 // pred_region
      _
    $region29: #{bbb_linear.1} parent=1 // pred_fallthru
      _
    %v30 = vld [vmem:[%s2] sm:$0xff]
    %v31 = vld [vmem:[%s2 + $0x8] sm:$0xff]
    %v32 = vld [vmem:[%s2 + $0x10] sm:$0xff]
    %v33 = vld [vmem:[%s2 + $0x18] sm:$0xff]
    %v34 = vld [vmem:[%s2 + $0x20] sm:$0xff]
    %v35 = vld [vmem:[%s2 + $0x28] sm:$0xff]
    %v36 = vld [vmem:[%s2 + $0x30] sm:$0xff]
    %v37 = vld [vmem:[%s2 + $0x38] sm:$0xff]
    %v38 = vld [vmem:[%s2 + $0x40] sm:$0xff]
    %v39 = vld [vmem:[%s2 + $0x48] sm:$0xff]
    %v40 = vld [vmem:[%s2 + $0x50] sm:$0xff]
    %v41 = vld [vmem:[%s2 + $0x58] sm:$0xff]
    %v42 = vld [vmem:[%s2 + $0x60] sm:$0xff]
    %v43 = vld [vmem:[%s2 + $0x68] sm:$0xff]
    %v44 = vld [vmem:[%s2 + $0x70] sm:$0xff]
    %v45 = vld [vmem:[%s2 + $0x78] sm:$0xff]
    %vm46 = vcmp.gt.f32.partialorder %v30, 20.0
    %vm47 = vcmp.gt.f32.partialorder %v31, 20.0
    %vm48 = vcmp.gt.f32.partialorder %v32, 20.0
    %vm49 = vcmp.gt.f32.partialorder %v33, 20.0
    %vm50 = vcmp.gt.f32.partialorder %v34, 20.0
    %vm51 = vcmp.gt.f32.partialorder %v35, 20.0
    %vm52 = vcmp.gt.f32.partialorder %v36, 20.0
    %vm53 = vcmp.gt.f32.partialorder %v37, 20.0
    %vm54 = vcmp.gt.f32.partialorder %v38, 20.0
    %vm55 = vcmp.gt.f32.partialorder %v39, 20.0
    %vm56 = vcmp.gt.f32.partialorder %v40, 20.0
    %vm57 = vcmp.gt.f32.partialorder %v41, 20.0
    %vm58 = vcmp.gt.f32.partialorder %v42, 20.0
    %vm59 = vcmp.gt.f32.partialorder %v43, 20.0
    %vm60 = vcmp.gt.f32.partialorder %v44, 20.0
    %vm61 = vcmp.gt.f32.partialorder %v45, 20.0
    %v62 = vmin.f32 %v30, 20.0
    %v63 = vmin.f32 %v31, 20.0
    %v64 = vmin.f32 %v32, 20.0
    %v65 = vmin.f32 %v33, 20.0
    %v66 = vmin.f32 %v34, 20.0
    %v67 = vmin.f32 %v35, 20.0
    %v68 = vmin.f32 %v36, 20.0
    %v69 = vmin.f32 %v37, 20.0
    %v70 = vmin.f32 %v38, 20.0
    %v71 = vmin.f32 %v39, 20.0
    %v72 = vmin.f32 %v40, 20.0
    %v73 = vmin.f32 %v41, 20.0
    %v74 = vmin.f32 %v42, 20.0
    %v75 = vmin.f32 %v43, 20.0
    %v76 = vmin.f32 %v44, 20.0
    %v77 = vmin.f32 %v45, 20.0
    %v78 = vmul.f32 %v62, 1.442695
    %v79 = vpow.pop %v78
    %v80 = vmul.f32 %v63, 1.442695
    %v81 = vpow.pop %v80
    %v82 = vmul.f32 %v64, 1.442695
    %v83 = vpow.pop %v82
    %v84 = vmul.f32 %v65, 1.442695
    %v85 = vpow.pop %v84
    %v86 = vmul.f32 %v66, 1.442695
    %v87 = vpow.pop %v86
    %v88 = vmul.f32 %v67, 1.442695
    %v89 = vpow.pop %v88
    %v90 = vmul.f32 %v68, 1.442695
    %v91 = vpow.pop %v90
    %v92 = vmul.f32 %v69, 1.442695
    %v93 = vpow.pop %v92
    %v94 = vmul.f32 %v70, 1.442695
    %v95 = vpow.pop %v94
    %v96 = vmul.f32 %v71, 1.442695
    %v97 = vpow.pop %v96
    %v98 = vmul.f32 %v72, 1.442695
    %v99 = vpow.pop %v98
    %v100 = vmul.f32 %v73, 1.442695
    %v101 = vpow.pop %v100
    %v102 = vmul.f32 %v74, 1.442695
    %v103 = vpow.pop %v102
    %v104 = vmul.f32 %v75, 1.442695
    %v105 = vpow.pop %v104
    %v106 = vmul.f32 %v76, 1.442695
    %v107 = vpow.pop %v106
    %v108 = vmul.f32 %v77, 1.442695
    %v109 = vpow.pop %v108
    %v110 = vadd.f32 %v79, 1.0
    %v111 = vlog2.pop %v110
    %v112 = vmul.f32 %v111, 0.6931472
    %v113 = vmul.f32 -0.5, %v79
    %v114 = vadd.f32 %v113, 1.0
    %v115 = vmul.f32 %v114, %v79
    %v116 = vand.u32 2147483647, %v79
    %vm117 = vcmp.lt.f32.partialorder %v116, 0.0004427343
    %v118 = vsel %vm117, %v115, %v112
    %v119 = vadd.f32 %v81, 1.0
    %v120 = vlog2.pop %v119
    %v121 = vmul.f32 %v120, 0.6931472
    %v122 = vmul.f32 -0.5, %v81
    %v123 = vadd.f32 %v122, 1.0
    %v124 = vmul.f32 %v123, %v81
    %v125 = vand.u32 2147483647, %v81
    %vm126 = vcmp.lt.f32.partialorder %v125, 0.0004427343
    %v127 = vsel %vm126, %v124, %v121
    %v128 = vadd.f32 %v83, 1.0
    %v129 = vlog2.pop %v128
    %v130 = vmul.f32 %v129, 0.6931472
    %v131 = vmul.f32 -0.5, %v83
    %v132 = vadd.f32 %v131, 1.0
    %v133 = vmul.f32 %v132, %v83
    %v134 = vand.u32 2147483647, %v83
    %vm135 = vcmp.lt.f32.partialorder %v134, 0.0004427343
    %v136 = vsel %vm135, %v133, %v130
    %v137 = vadd.f32 %v85, 1.0
    %v138 = vlog2.pop %v137
    %v139 = vmul.f32 %v138, 0.6931472
    %v140 = vmul.f32 -0.5, %v85
    %v141 = vadd.f32 %v140, 1.0
    %v142 = vmul.f32 %v141, %v85
    %v143 = vand.u32 2147483647, %v85
    %vm144 = vcmp.lt.f32.partialorder %v143, 0.0004427343
    %v145 = vsel %vm144, %v142, %v139
    %v146 = vadd.f32 %v87, 1.0
    %v147 = vlog2.pop %v146
    %v148 = vmul.f32 %v147, 0.6931472
    %v149 = vmul.f32 -0.5, %v87
    %v150 = vadd.f32 %v149, 1.0
    %v151 = vmul.f32 %v150, %v87
    %v152 = vand.u32 2147483647, %v87
    %vm153 = vcmp.lt.f32.partialorder %v152, 0.0004427343
    %v154 = vsel %vm153, %v151, %v148
    %v155 = vadd.f32 %v89, 1.0
    %v156 = vlog2.pop %v155
    %v157 = vmul.f32 %v156, 0.6931472
    %v158 = vmul.f32 -0.5, %v89
    %v159 = vadd.f32 %v158, 1.0
    %v160 = vmul.f32 %v159, %v89
    %v161 = vand.u32 2147483647, %v89
    %vm162 = vcmp.lt.f32.partialorder %v161, 0.0004427343
    %v163 = vsel %vm162, %v160, %v157
    %v164 = vadd.f32 %v91, 1.0
    %v165 = vlog2.pop %v164
    %v166 = vmul.f32 %v165, 0.6931472
    %v167 = vmul.f32 -0.5, %v91
    %v168 = vadd.f32 %v167, 1.0
    %v169 = vmul.f32 %v168, %v91
    %v170 = vand.u32 2147483647, %v91
    %vm171 = vcmp.lt.f32.partialorder %v170, 0.0004427343
    %v172 = vsel %vm171, %v169, %v166
    %v173 = vadd.f32 %v93, 1.0
    %v174 = vlog2.pop %v173
    %v175 = vmul.f32 %v174, 0.6931472
    %v176 = vmul.f32 -0.5, %v93
    %v177 = vadd.f32 %v176, 1.0
    %v178 = vmul.f32 %v177, %v93
    %v179 = vand.u32 2147483647, %v93
    %vm180 = vcmp.lt.f32.partialorder %v179, 0.0004427343
    %v181 = vsel %vm180, %v178, %v175
    %v182 = vadd.f32 %v95, 1.0
    %v183 = vlog2.pop %v182
    %v184 = vmul.f32 %v183, 0.6931472
    %v185 = vmul.f32 -0.5, %v95
    %v186 = vadd.f32 %v185, 1.0
    %v187 = vmul.f32 %v186, %v95
    %v188 = vand.u32 2147483647, %v95
    %vm189 = vcmp.lt.f32.partialorder %v188, 0.0004427343
    %v190 = vsel %vm189, %v187, %v184
    %v191 = vadd.f32 %v97, 1.0
    %v192 = vlog2.pop %v191
    %v193 = vmul.f32 %v192, 0.6931472
    %v194 = vmul.f32 -0.5, %v97
    %v195 = vadd.f32 %v194, 1.0
    %v196 = vmul.f32 %v195, %v97
    %v197 = vand.u32 2147483647, %v97
    %vm198 = vcmp.lt.f32.partialorder %v197, 0.0004427343
    %v199 = vsel %vm198, %v196, %v193
    %v200 = vadd.f32 %v99, 1.0
    %v201 = vlog2.pop %v200
    %v202 = vmul.f32 %v201, 0.6931472
    %v203 = vmul.f32 -0.5, %v99
    %v204 = vadd.f32 %v203, 1.0
    %v205 = vmul.f32 %v204, %v99
    %v206 = vand.u32 2147483647, %v99
    %vm207 = vcmp.lt.f32.partialorder %v206, 0.0004427343
    %v208 = vsel %vm207, %v205, %v202
    %v209 = vadd.f32 %v101, 1.0
    %v210 = vlog2.pop %v209
    %v211 = vmul.f32 %v210, 0.6931472
    %v212 = vmul.f32 -0.5, %v101
    %v213 = vadd.f32 %v212, 1.0
    %v214 = vmul.f32 %v213, %v101
    %v215 = vand.u32 2147483647, %v101
    %vm216 = vcmp.lt.f32.partialorder %v215, 0.0004427343
    %v217 = vsel %vm216, %v214, %v211
    %v218 = vadd.f32 %v103, 1.0
    %v219 = vlog2.pop %v218
    %v220 = vmul.f32 %v219, 0.6931472
    %v221 = vmul.f32 -0.5, %v103
    %v222 = vadd.f32 %v221, 1.0
    %v223 = vmul.f32 %v222, %v103
    %v224 = vand.u32 2147483647, %v103
    %vm225 = vcmp.lt.f32.partialorder %v224, 0.0004427343
    %v226 = vsel %vm225, %v223, %v220
    %v227 = vadd.f32 %v105, 1.0
    %v228 = vlog2.pop %v227
    %v229 = vmul.f32 %v228, 0.6931472
    %v230 = vmul.f32 -0.5, %v105
    %v231 = vadd.f32 %v230, 1.0
    %v232 = vmul.f32 %v231, %v105
    %v233 = vand.u32 2147483647, %v105
    %vm234 = vcmp.lt.f32.partialorder %v233, 0.0004427343
    %v235 = vsel %vm234, %v232, %v229
    %v236 = vadd.f32 %v107, 1.0
    %v237 = vlog2.pop %v236
    %v238 = vmul.f32 %v237, 0.6931472
    %v239 = vmul.f32 -0.5, %v107
    %v240 = vadd.f32 %v239, 1.0
    %v241 = vmul.f32 %v240, %v107
    %v242 = vand.u32 2147483647, %v107
    %vm243 = vcmp.lt.f32.partialorder %v242, 0.0004427343
    %v244 = vsel %vm243, %v241, %v238
    %v245 = vadd.f32 %v109, 1.0
    %v246 = vlog2.pop %v245
    %v247 = vmul.f32 %v246, 0.6931472
    %v248 = vmul.f32 -0.5, %v109
    %v249 = vadd.f32 %v248, 1.0
    %v250 = vmul.f32 %v249, %v109
    %v251 = vand.u32 2147483647, %v109
    %vm252 = vcmp.lt.f32.partialorder %v251, 0.0004427343
    %v253 = vsel %vm252, %v250, %v247
    %v254 = vsel %vm46, %v30, %v118
    %v255 = vsel %vm47, %v31, %v127
    %v256 = vsel %vm48, %v32, %v136
    %v257 = vsel %vm49, %v33, %v145
    %v258 = vsel %vm50, %v34, %v154
    %v259 = vsel %vm51, %v35, %v163
    %v260 = vsel %vm52, %v36, %v172
    %v261 = vsel %vm53, %v37, %v181
    %v262 = vsel %vm54, %v38, %v190
    %v263 = vsel %vm55, %v39, %v199
    %v264 = vsel %vm56, %v40, %v208
    %v265 = vsel %vm57, %v41, %v217
    %v266 = vsel %vm58, %v42, %v226
    %v267 = vsel %vm59, %v43, %v235
    %v268 = vsel %vm60, %v44, %v244
    %v269 = vsel %vm61, %v45, %v253
    %v270 = vld [vmem:[%s3] sm:$0xff]
    %v271 = vld [vmem:[%s3 + $0x8] sm:$0xff]
    %v272 = vld [vmem:[%s3 + $0x10] sm:$0xff]
    %v273 = vld [vmem:[%s3 + $0x18] sm:$0xff]
    %v274 = vld [vmem:[%s3 + $0x20] sm:$0xff]
    %v275 = vld [vmem:[%s3 + $0x28] sm:$0xff]
    %v276 = vld [vmem:[%s3 + $0x30] sm:$0xff]
    %v277 = vld [vmem:[%s3 + $0x38] sm:$0xff]
    %v278 = vld [vmem:[%s3 + $0x40] sm:$0xff]
    %v279 = vld [vmem:[%s3 + $0x48] sm:$0xff]
    %v280 = vld [vmem:[%s3 + $0x50] sm:$0xff]
    %v281 = vld [vmem:[%s3 + $0x58] sm:$0xff]
    %v282 = vld [vmem:[%s3 + $0x60] sm:$0xff]
    %v283 = vld [vmem:[%s3 + $0x68] sm:$0xff]
    %v284 = vld [vmem:[%s3 + $0x70] sm:$0xff]
    %v285 = vld [vmem:[%s3 + $0x78] sm:$0xff]
    %v286 = vld [vmem:[%s1] sm:$0xff]
    %v287 = vld [vmem:[%s1 + $0x8] sm:$0xff]
    %v288 = vld [vmem:[%s1 + $0x10] sm:$0xff]
    %v289 = vld [vmem:[%s1 + $0x18] sm:$0xff]
    %v290 = vld [vmem:[%s1 + $0x20] sm:$0xff]
    %v291 = vld [vmem:[%s1 + $0x28] sm:$0xff]
    %v292 = vld [vmem:[%s1 + $0x30] sm:$0xff]
    %v293 = vld [vmem:[%s1 + $0x38] sm:$0xff]
    %v294 = vld [vmem:[%s1 + $0x40] sm:$0xff]
    %v295 = vld [vmem:[%s1 + $0x48] sm:$0xff]
    %v296 = vld [vmem:[%s1 + $0x50] sm:$0xff]
    %v297 = vld [vmem:[%s1 + $0x58] sm:$0xff]
    %v298 = vld [vmem:[%s1 + $0x60] sm:$0xff]
    %v299 = vld [vmem:[%s1 + $0x68] sm:$0xff]
    %v300 = vld [vmem:[%s1 + $0x70] sm:$0xff]
    %v301 = vld [vmem:[%s1 + $0x78] sm:$0xff]
    %v302 = vmul.f32 %v254, %v270
    %v303 = vmul.f32 %v255, %v271
    %v304 = vmul.f32 %v256, %v272
    %v305 = vmul.f32 %v257, %v273
    %v306 = vmul.f32 %v258, %v274
    %v307 = vmul.f32 %v259, %v275
    %v308 = vmul.f32 %v260, %v276
    %v309 = vmul.f32 %v261, %v277
    %v310 = vmul.f32 %v262, %v278
    %v311 = vmul.f32 %v263, %v279
    %v312 = vmul.f32 %v264, %v280
    %v313 = vmul.f32 %v265, %v281
    %v314 = vmul.f32 %v266, %v282
    %v315 = vmul.f32 %v267, %v283
    %v316 = vmul.f32 %v268, %v284
    %v317 = vmul.f32 %v269, %v285
    %v318 = vadd.f32 %v286, %v302
    %v319 = vadd.f32 %v287, %v303
    %v320 = vadd.f32 %v288, %v304
    %v321 = vadd.f32 %v289, %v305
    %v322 = vadd.f32 %v290, %v306
    %v323 = vadd.f32 %v291, %v307
    %v324 = vadd.f32 %v292, %v308
    %v325 = vadd.f32 %v293, %v309
    %v326 = vadd.f32 %v294, %v310
    %v327 = vadd.f32 %v295, %v311
    %v328 = vadd.f32 %v296, %v312
    %v329 = vadd.f32 %v297, %v313
    %v330 = vadd.f32 %v298, %v314
    %v331 = vadd.f32 %v299, %v315
    %v332 = vadd.f32 %v300, %v316
    %v333 = vadd.f32 %v301, %v317
    %p334 = scmp.eq.s32.totalorder 0, 0
    // Predicated region
    $region30: #{bbb_linear.1} parent=1 // pred_check
      %p335 = pneg %p334
    $region31: #{bbb_linear.1} parent=1 // pred_check_branch
      %337 = sbr.rel (%p335) target = $region33
    $region32: #{bbb_linear.1} parent=1 // pred_region
      %v338 = vmul.f32 %v318, %v318
      %v339 = vmul.f32 %v319, %v319
      %v340 = vmul.f32 %v320, %v320
      %v341 = vmul.f32 %v321, %v321
      %v342 = vmul.f32 %v322, %v322
      %v343 = vmul.f32 %v323, %v323
      %v344 = vmul.f32 %v324, %v324
      %v345 = vmul.f32 %v325, %v325
      %v346 = vmul.f32 %v326, %v326
      %v347 = vmul.f32 %v327, %v327
      %v348 = vmul.f32 %v328, %v328
      %v349 = vmul.f32 %v329, %v329
      %v350 = vmul.f32 %v330, %v330
      %v351 = vmul.f32 %v331, %v331
      %v352 = vmul.f32 %v332, %v332
      %v353 = vmul.f32 %v333, %v333
      %v354 = vsub.f32 0.0, %v338
      %v355 = vsub.f32 0.0, %v339
      %v356 = vsub.f32 0.0, %v340
      %v357 = vsub.f32 0.0, %v341
      %v358 = vsub.f32 0.0, %v342
      %v359 = vsub.f32 0.0, %v343
      %v360 = vsub.f32 0.0, %v344
      %v361 = vsub.f32 0.0, %v345
      %v362 = vsub.f32 0.0, %v346
      %v363 = vsub.f32 0.0, %v347
      %v364 = vsub.f32 0.0, %v348
      %v365 = vsub.f32 0.0, %v349
      %v366 = vsub.f32 0.0, %v350
      %v367 = vsub.f32 0.0, %v351
      %v368 = vsub.f32 0.0, %v352
      %v369 = vsub.f32 0.0, %v353
      %v370 = vmul.f32 %v354, 0.013888889
      %v371 = vmul.f32 %v355, 0.013888889
      %v372 = vmul.f32 %v356, 0.013888889
      %v373 = vmul.f32 %v357, 0.013888889
      %v374 = vmul.f32 %v358, 0.013888889
      %v375 = vmul.f32 %v359, 0.013888889
      %v376 = vmul.f32 %v360, 0.013888889
      %v377 = vmul.f32 %v361, 0.013888889
      %v378 = vmul.f32 %v362, 0.013888889
      %v379 = vmul.f32 %v363, 0.013888889
      %v380 = vmul.f32 %v364, 0.013888889
      %v381 = vmul.f32 %v365, 0.013888889
      %v382 = vmul.f32 %v366, 0.013888889
      %v383 = vmul.f32 %v367, 0.013888889
      %v384 = vmul.f32 %v368, 0.013888889
      %v385 = vmul.f32 %v369, 0.013888889
      %v386 = vsub.f32 %v370, 2.710698
      %v387 = vsub.f32 %v371, 2.710698
      %v388 = vsub.f32 %v372, 2.710698
      %v389 = vsub.f32 %v373, 2.710698
      %v390 = vsub.f32 %v374, 2.710698
      %v391 = vsub.f32 %v375, 2.710698
      %v392 = vsub.f32 %v376, 2.710698
      %v393 = vsub.f32 %v377, 2.710698
      %v394 = vsub.f32 %v378, 2.710698
      %v395 = vsub.f32 %v379, 2.710698
      %v396 = vsub.f32 %v380, 2.710698
      %v397 = vsub.f32 %v381, 2.710698
      %v398 = vsub.f32 %v382, 2.710698
      %v399 = vsub.f32 %v383, 2.710698
      %v400 = vsub.f32 %v384, 2.710698
      %v401 = vsub.f32 %v385, 2.710698
      %v402 = vmul.f32 %v270, %v270
      %v403 = vmul.f32 %v271, %v271
      %v404 = vmul.f32 %v272, %v272
      %v405 = vmul.f32 %v273, %v273
      %v406 = vmul.f32 %v274, %v274
      %v407 = vmul.f32 %v275, %v275
      %v408 = vmul.f32 %v276, %v276
      %v409 = vmul.f32 %v277, %v277
      %v410 = vmul.f32 %v278, %v278
      %v411 = vmul.f32 %v279, %v279
      %v412 = vmul.f32 %v280, %v280
      %v413 = vmul.f32 %v281, %v281
      %v414 = vmul.f32 %v282, %v282
      %v415 = vmul.f32 %v283, %v283
      %v416 = vmul.f32 %v284, %v284
      %v417 = vmul.f32 %v285, %v285
      %v418 = vmul.f32 %v402, -0.5
      %v419 = vmul.f32 %v403, -0.5
      %v420 = vmul.f32 %v404, -0.5
      %v421 = vmul.f32 %v405, -0.5
      %v422 = vmul.f32 %v406, -0.5
      %v423 = vmul.f32 %v407, -0.5
      %v424 = vmul.f32 %v408, -0.5
      %v425 = vmul.f32 %v409, -0.5
      %v426 = vmul.f32 %v410, -0.5
      %v427 = vmul.f32 %v411, -0.5
      %v428 = vmul.f32 %v412, -0.5
      %v429 = vmul.f32 %v413, -0.5
      %v430 = vmul.f32 %v414, -0.5
      %v431 = vmul.f32 %v415, -0.5
      %v432 = vmul.f32 %v416, -0.5
      %v433 = vmul.f32 %v417, -0.5
      %v434 = vlog2.pop %v254
      %v435 = vmul.f32 %v434, 0.6931472
      %v436 = vlog2.pop %v255
      %v437 = vmul.f32 %v436, 0.6931472
      %v438 = vlog2.pop %v256
      %v439 = vmul.f32 %v438, 0.6931472
      %v440 = vlog2.pop %v257
      %v441 = vmul.f32 %v440, 0.6931472
      %v442 = vlog2.pop %v258
      %v443 = vmul.f32 %v442, 0.6931472
      %v444 = vlog2.pop %v259
      %v445 = vmul.f32 %v444, 0.6931472
      %v446 = vlog2.pop %v260
      %v447 = vmul.f32 %v446, 0.6931472
      %v448 = vlog2.pop %v261
      %v449 = vmul.f32 %v448, 0.6931472
      %v450 = vlog2.pop %v262
      %v451 = vmul.f32 %v450, 0.6931472
      %v452 = vlog2.pop %v263
      %v453 = vmul.f32 %v452, 0.6931472
      %v454 = vlog2.pop %v264
      %v455 = vmul.f32 %v454, 0.6931472
      %v456 = vlog2.pop %v265
      %v457 = vmul.f32 %v456, 0.6931472
      %v458 = vlog2.pop %v266
      %v459 = vmul.f32 %v458, 0.6931472
      %v460 = vlog2.pop %v267
      %v461 = vmul.f32 %v460, 0.6931472
      %v462 = vlog2.pop %v268
      %v463 = vmul.f32 %v462, 0.6931472
      %v464 = vlog2.pop %v269
      %v465 = vmul.f32 %v464, 0.6931472
      %v466 = vsub.f32 %v418, %v435
      %v467 = vsub.f32 %v419, %v437
      %v468 = vsub.f32 %v420, %v439
      %v469 = vsub.f32 %v421, %v441
      %v470 = vsub.f32 %v422, %v443
      %v471 = vsub.f32 %v423, %v445
      %v472 = vsub.f32 %v424, %v447
      %v473 = vsub.f32 %v425, %v449
      %v474 = vsub.f32 %v426, %v451
      %v475 = vsub.f32 %v427, %v453
      %v476 = vsub.f32 %v428, %v455
      %v477 = vsub.f32 %v429, %v457
      %v478 = vsub.f32 %v430, %v459
      %v479 = vsub.f32 %v431, %v461
      %v480 = vsub.f32 %v432, %v463
      %v481 = vsub.f32 %v433, %v465
      %v482 = vsub.f32 %v466, 0.9189385
      %v483 = vsub.f32 %v467, 0.9189385
      %v484 = vsub.f32 %v468, 0.9189385
      %v485 = vsub.f32 %v469, 0.9189385
      %v486 = vsub.f32 %v470, 0.9189385
      %v487 = vsub.f32 %v471, 0.9189385
      %v488 = vsub.f32 %v472, 0.9189385
      %v489 = vsub.f32 %v473, 0.9189385
      %v490 = vsub.f32 %v474, 0.9189385
      %v491 = vsub.f32 %v475, 0.9189385
      %v492 = vsub.f32 %v476, 0.9189385
      %v493 = vsub.f32 %v477, 0.9189385
      %v494 = vsub.f32 %v478, 0.9189385
      %v495 = vsub.f32 %v479, 0.9189385
      %v496 = vsub.f32 %v480, 0.9189385
      %v497 = vsub.f32 %v481, 0.9189385
      %v498 = vlaneseq
      %v499 = vshrl.u32 %v498, 7
      %v500 = vadd.s32 %v499, 8
      %v501 = vadd.s32 %v499, 16
      %v502 = vadd.s32 %v499, 24
      %v503 = vadd.s32 %v499, 32
      %v504 = vadd.s32 %v499, 40
      %v505 = vadd.s32 %v499, 48
      %v506 = vadd.s32 %v499, 56
      %v507 = vadd.s32 %v499, 64
      %v508 = vadd.s32 %v499, 72
      %v509 = vadd.s32 %v499, 80
      %v510 = vadd.s32 %v499, 88
      %v511 = vadd.s32 %v499, 96
      %v512 = vadd.s32 %v499, 104
      %v513 = vadd.s32 %v499, 112
      %v514 = vadd.s32 %v499, 120
      %s515 = smul.u32 0, 128
      %v516 = vstv %s515
      %v517 = vadd.s32 %v499, %v516
      %v518 = vadd.s32 %v500, %v516
      %v519 = vadd.s32 %v501, %v516
      %v520 = vadd.s32 %v502, %v516
      %v521 = vadd.s32 %v503, %v516
      %v522 = vadd.s32 %v504, %v516
      %v523 = vadd.s32 %v505, %v516
      %v524 = vadd.s32 %v506, %v516
      %v525 = vadd.s32 %v507, %v516
      %v526 = vadd.s32 %v508, %v516
      %v527 = vadd.s32 %v509, %v516
      %v528 = vadd.s32 %v510, %v516
      %v529 = vadd.s32 %v511, %v516
      %v530 = vadd.s32 %v512, %v516
      %v531 = vadd.s32 %v513, %v516
      %v532 = vadd.s32 %v514, %v516
      %v533 = vlaneseq
      %v534 = vand.u32 %v533, 127
      %s535 = smul.u32 0, 128
      %v536 = vstv %s535
      %v537 = vadd.s32 %v534, %v536
      %vm538 = vcmp.lt.s32.totalorder %v517, 32
      %vm539 = vcmp.lt.s32.totalorder %v518, 32
      %vm540 = vcmp.lt.s32.totalorder %v519, 32
      %vm541 = vcmp.lt.s32.totalorder %v520, 32
      %vm542 = vcmp.lt.s32.totalorder %v521, 32
      %vm543 = vcmp.lt.s32.totalorder %v522, 32
      %vm544 = vcmp.lt.s32.totalorder %v523, 32
      %vm545 = vcmp.lt.s32.totalorder %v524, 32
      %vm546 = vcmp.lt.s32.totalorder %v525, 32
      %vm547 = vcmp.lt.s32.totalorder %v526, 32
      %vm548 = vcmp.lt.s32.totalorder %v527, 32
      %vm549 = vcmp.lt.s32.totalorder %v528, 32
      %vm550 = vcmp.lt.s32.totalorder %v529, 32
      %vm551 = vcmp.lt.s32.totalorder %v530, 32
      %vm552 = vcmp.lt.s32.totalorder %v531, 32
      %vm553 = vcmp.lt.s32.totalorder %v532, 32
      %vm554 = vcmp.lt.s32.totalorder %v537, 16
      %vm555 = vmand %vm538, %vm554
      %vm556 = vmand %vm539, %vm554
      %vm557 = vmand %vm540, %vm554
      %vm558 = vmand %vm541, %vm554
      %vm559 = vmand %vm542, %vm554
      %vm560 = vmand %vm543, %vm554
      %vm561 = vmand %vm544, %vm554
      %vm562 = vmand %vm545, %vm554
      %vm563 = vmand %vm546, %vm554
      %vm564 = vmand %vm547, %vm554
      %vm565 = vmand %vm548, %vm554
      %vm566 = vmand %vm549, %vm554
      %vm567 = vmand %vm550, %vm554
      %vm568 = vmand %vm551, %vm554
      %vm569 = vmand %vm552, %vm554
      %vm570 = vmand %vm553, %vm554
      %v571 = vsel %vm555, %v386, 0.0
      %v572 = vsel %vm556, %v387, 0.0
      %v573 = vsel %vm557, %v388, 0.0
      %v574 = vsel %vm558, %v389, 0.0
      %v575 = vsel %vm559, %v390, 0.0
      %v576 = vsel %vm560, %v391, 0.0
      %v577 = vsel %vm561, %v392, 0.0
      %v578 = vsel %vm562, %v393, 0.0
      %v579 = vsel %vm563, %v394, 0.0
      %v580 = vsel %vm564, %v395, 0.0
      %v581 = vsel %vm565, %v396, 0.0
      %v582 = vsel %vm566, %v397, 0.0
      %v583 = vsel %vm567, %v398, 0.0
      %v584 = vsel %vm568, %v399, 0.0
      %v585 = vsel %vm569, %v400, 0.0
      %v586 = vsel %vm570, %v401, 0.0
      %v587 = vsel %vm555, %v482, 0.0
      %v588 = vsel %vm556, %v483, 0.0
      %v589 = vsel %vm557, %v484, 0.0
      %v590 = vsel %vm558, %v485, 0.0
      %v591 = vsel %vm559, %v486, 0.0
      %v592 = vsel %vm560, %v487, 0.0
      %v593 = vsel %vm561, %v488, 0.0
      %v594 = vsel %vm562, %v489, 0.0
      %v595 = vsel %vm563, %v490, 0.0
      %v596 = vsel %vm564, %v491, 0.0
      %v597 = vsel %vm565, %v492, 0.0
      %v598 = vsel %vm566, %v493, 0.0
      %v599 = vsel %vm567, %v494, 0.0
      %v600 = vsel %vm568, %v495, 0.0
      %v601 = vsel %vm569, %v496, 0.0
      %v602 = vsel %vm570, %v497, 0.0
      %v603 = vadd.f32 %v571, %v572
      %v604 = vadd.f32 %v603, %v573
      %v605 = vadd.f32 %v604, %v574
      %v606 = vadd.f32 %v605, %v575
      %v607 = vadd.f32 %v606, %v576
      %v608 = vadd.f32 %v607, %v577
      %v609 = vadd.f32 %v608, %v578
      %v610 = vadd.f32 %v609, %v579
      %v611 = vadd.f32 %v610, %v580
      %v612 = vadd.f32 %v611, %v581
      %v613 = vadd.f32 %v612, %v582
      %v614 = vadd.f32 %v613, %v583
      %v615 = vadd.f32 %v614, %v584
      %v616 = vadd.f32 %v615, %v585
      %v617 = vadd.f32 %v616, %v586
      %618 = vadd.xlane.f32.xlu0 %v617
      %v619 = vpop.xlane.xlu0 %618
      %v620 = vrot.slane %v619, 4
      %v621 = vadd.f32 %v619, %v620
      %v622 = vrot.slane %v621, 2
      %v623 = vadd.f32 %v621, %v622
      %v624 = vrot.slane %v623, 1
      %v625 = vadd.f32 %v623, %v624
      %s626 = vtos %v625
      %v627 = vstv %s626
      %v628 = vadd.f32 %v587, %v588
      %v629 = vadd.f32 %v628, %v589
      %v630 = vadd.f32 %v629, %v590
      %v631 = vadd.f32 %v630, %v591
      %v632 = vadd.f32 %v631, %v592
      %v633 = vadd.f32 %v632, %v593
      %v634 = vadd.f32 %v633, %v594
      %v635 = vadd.f32 %v634, %v595
      %v636 = vadd.f32 %v635, %v596
      %v637 = vadd.f32 %v636, %v597
      %v638 = vadd.f32 %v637, %v598
      %v639 = vadd.f32 %v638, %v599
      %v640 = vadd.f32 %v639, %v600
      %v641 = vadd.f32 %v640, %v601
      %v642 = vadd.f32 %v641, %v602
      %643 = vadd.xlane.f32.xlu0 %v642
      %v644 = vpop.xlane.xlu0 %643
      %v645 = vrot.slane %v644, 4
      %v646 = vadd.f32 %v644, %v645
      %v647 = vrot.slane %v646, 2
      %v648 = vadd.f32 %v646, %v647
      %v649 = vrot.slane %v648, 1
      %v650 = vadd.f32 %v648, %v649
      %s651 = vtos %v650
      %v652 = vstv %s651
      %p653 = scmp.eq.s32.totalorder 0, 0
      // Predicated region
      $region34: #{bbb_linear.1} parent=32 // pred_check
        %p654 = pneg %p653
      $region35: #{bbb_linear.1} parent=32 // pred_check_branch
        %656 = sbr.rel (%p654) target = $region37
      $region36: #{bbb_linear.1} parent=32 // pred_region
        %v657 = vld [vmem:[%s5] sm:$0x1]
        %v658 = vld [vmem:[%s6] sm:$0x1]
        %vm659 = vcmp.gt.f32.partialorder %v657, 20.0
        %v660 = vmin.f32 %v657, 20.0
        %v661 = vmul.f32 %v660, 1.442695
        %v662 = vpow.pop %v661
        %v663 = vadd.f32 %v662, 1.0
        %v664 = vlog2.pop %v663
        %v665 = vmul.f32 %v664, 0.6931472
        %v666 = vmul.f32 -0.5, %v662
        %v667 = vadd.f32 %v666, 1.0
        %v668 = vmul.f32 %v667, %v662
        %v669 = vand.u32 2147483647, %v662
        %vm670 = vcmp.lt.f32.partialorder %v669, 0.0004427343
        %v671 = vsel %vm670, %v668, %v665
        %v672 = vsel %vm659, %v657, %v671
        %v673 = vld [vmem:[%s4] sm:$0x1]
        %v674 = vmul.f32 %v672, %v658
        %v675 = vadd.f32 %v673, %v674
        %v676 = vmul.f32 %v675, %v675
        %v677 = vsub.f32 0.0, %v676
        %v678 = vmul.f32 %v677, 0.013888889
        %v679 = vsub.f32 %v678, 2.710698
        %v680 = vmul.f32 %v658, %v658
        %v681 = vmul.f32 %v680, -0.5
        %v682 = vlog2.pop %v672
        %v683 = vmul.f32 %v682, 0.6931472
        %v684 = vsub.f32 %v681, %v683
        %v685 = vsub.f32 %v684, 0.9189385
        %v686 = vsel %vm554, %v679, 0.0
        %v687 = vsel %vm554, %v685, 0.0
        %vm688 = vcmask 1040384
        %v689 = vsel %vm688, %v686, 0.0
        %690 = vadd.xlane.f32.xlu0 %v689
        %v691 = vpop.xlane.xlu0 %690
        %v692 = vrot.slane %v691, 4
        %v693 = vadd.f32 %v691, %v692
        %v694 = vrot.slane %v693, 2
        %v695 = vadd.f32 %v693, %v694
        %v696 = vrot.slane %v695, 1
        %v697 = vadd.f32 %v695, %v696
        %s698 = vtos %v697
        %v699 = vstv %s698
        %v700 = vadd.f32 %v627, %v699
        %v701 = vsel %vm688, %v687, 0.0
        %702 = vadd.xlane.f32.xlu0 %v701
        %v703 = vpop.xlane.xlu0 %702
        %v704 = vrot.slane %v703, 4
        %v705 = vadd.f32 %v703, %v704
        %v706 = vrot.slane %v705, 2
        %v707 = vadd.f32 %v705, %v706
        %v708 = vrot.slane %v707, 1
        %v709 = vadd.f32 %v707, %v708
        %s710 = vtos %v709
        %v711 = vstv %s710
        %v712 = vadd.f32 %v652, %v711
        %713 = vst [vmem:[%s8] sm:$0xff] %v700
        %714 = vst [vmem:[%s9] sm:$0xff] %v712
      $region37: #{bbb_linear.1} parent=32 // pred_fallthru
        _
      %p715 = scmp.gt.s32.totalorder 0, 0
      // Predicated region
      $region38: #{bbb_linear.1} parent=32 // pred_check
        %p716 = pneg %p715
      $region39: #{bbb_linear.1} parent=32 // pred_check_branch
        %718 = sbr.rel (%p716) target = $region41
      $region40: #{bbb_linear.1} parent=32 // pred_region
        %v719 = vld [vmem:[%s8] sm:$0xff]
        %v720 = vadd.f32 %v719, %v627
        %721 = vst [vmem:[%s8] sm:$0xff] %v720
        %v722 = vld [vmem:[%s9] sm:$0xff]
        %v723 = vadd.f32 %v722, %v652
        %724 = vst [vmem:[%s9] sm:$0xff] %v723
      $region41: #{bbb_linear.1} parent=32 // pred_fallthru
        _
    $region33: #{bbb_linear.1} parent=1 // pred_fallthru
      _
    %p725 = scmp.gt.s32.totalorder 0, 0
    %p726 = scmp.eq.s32.totalorder 0, 0
    %p727 = pnand %p725, %p726
    %p728 = pneg %p727
    // Predicated region
    $region42: #{bbb_linear.1} parent=1 // pred_check
      _
    $region43: #{bbb_linear.1} parent=1 // pred_check_branch
      %730 = sbr.rel (%p727) target = $region45
    $region44: #{bbb_linear.1} parent=1 // pred_region
      %731 = vst [vmem:[%s8] sm:$0xff] 0.0
      %732 = vst [vmem:[%s9] sm:$0xff] 0.0
    $region45: #{bbb_linear.1} parent=1 // pred_fallthru
      _
    %v733 = vld [vmem:[%s0] sm:$0xff]
    %734 = vmatprep.subr.mxu0 0.0
    %735 = vmatpush1.msra.mxu0 %v318
    %736 = vmatprep.subr.mxu0 0.0
    %737 = vmatpush1.msra.mxu0 %v319
    %738 = vmatprep.subr.mxu0 0.0
    %739 = vmatpush1.msra.mxu0 %v320
    %740 = vmatprep.subr.mxu0 0.0
    %741 = vmatpush1.msra.mxu0 %v321
    %742 = vmatprep.subr.mxu0 0.0
    %743 = vmatpush1.msra.mxu0 %v322
    %744 = vmatprep.subr.mxu0 0.0
    %745 = vmatpush1.msra.mxu0 %v323
    %746 = vmatprep.subr.mxu0 0.0
    %747 = vmatpush1.msra.mxu0 %v324
    %748 = vmatprep.subr.mxu0 0.0
    %749 = vmatpush1.msra.mxu0 %v325
    %750 = vmatprep.subr.mxu0 0.0
    %751 = vmatpush1.msra.mxu0 %v326
    %752 = vmatprep.subr.mxu0 0.0
    %753 = vmatpush1.msra.mxu0 %v327
    %754 = vmatprep.subr.mxu0 0.0
    %755 = vmatpush1.msra.mxu0 %v328
    %756 = vmatprep.subr.mxu0 0.0
    %757 = vmatpush1.msra.mxu0 %v329
    %758 = vmatprep.subr.mxu0 0.0
    %759 = vmatpush1.msra.mxu0 %v330
    %760 = vmatprep.subr.mxu0 0.0
    %761 = vmatpush1.msra.mxu0 %v331
    %762 = vmatprep.subr.mxu0 0.0
    %763 = vmatpush1.msra.mxu0 %v332
    %764 = vmatprep.subr.mxu0 0.0
    %765 = vmatpush1.msra.mxu0 %v333
    %766 = vmatprep.subr.mxu0 0.0
    %767 = vmatpush1.msra.mxu0 0.0
    %768 = vmatprep.subr.mxu0 0.0
    %769 = vmatpush1.msra.mxu0 0.0
    %770 = vmatprep.subr.mxu0 0.0
    %771 = vmatpush1.msra.mxu0 0.0
    %772 = vmatprep.subr.mxu0 0.0
    %773 = vmatpush1.msra.mxu0 0.0
    %774 = vmatprep.subr.mxu0 0.0
    %775 = vmatpush1.msra.mxu0 0.0
    %776 = vmatprep.subr.mxu0 0.0
    %777 = vmatpush1.msra.mxu0 0.0
    %778 = vmatprep.subr.mxu0 0.0
    %779 = vmatpush1.msra.mxu0 0.0
    %780 = vmatprep.subr.mxu0 0.0
    %781 = vmatpush1.msra.mxu0 0.0
    %782 = vmatprep.subr.mxu0 0.0
    %783 = vmatpush1.msra.mxu0 0.0
    %784 = vmatprep.subr.mxu0 0.0
    %785 = vmatpush1.msra.mxu0 0.0
    %786 = vmatprep.subr.mxu0 0.0
    %787 = vmatpush1.msra.mxu0 0.0
    %788 = vmatprep.subr.mxu0 0.0
    %789 = vmatpush1.msra.mxu0 0.0
    %790 = vmatprep.subr.mxu0 0.0
    %791 = vmatpush1.msra.mxu0 0.0
    %792 = vmatprep.subr.mxu0 0.0
    %793 = vmatpush1.msra.mxu0 0.0
    %794 = vmatprep.subr.mxu0 0.0
    %795 = vmatpush1.msra.mxu0 0.0
    %796 = vmatprep.subr.mxu0 0.0
    %797 = vmatpush1.msra.mxu0 0.0
    %798 = vmatprep.mubr.f32.mxu0 0.0
    %799 = vmatmul.mubr.f32.gmra.mrb[0].mxu0 %v733
    %v800 = vpop.f32.mrb[0].mxu0
    %v801 = vadd.f32 0.0, %v800
    %v802 = vpop.f32.mrb[0].mxu0
    %803 = vdwg.mxu0
    // Predicated region
    $region46: #{bbb_linear.1} parent=1 // pred_check
      %p804 = pneg %p726
    $region47: #{bbb_linear.1} parent=1 // pred_check_branch
      %806 = sbr.rel (%p804) target = $region49
    $region48: #{bbb_linear.1} parent=1 // pred_region
      %807 = vst [vmem:[#allocation2] sm:$0xff] %v801
    $region49: #{bbb_linear.1} parent=1 // pred_fallthru
      _
    %p808 = scmp.gt.s32.totalorder 0, 0
    // Predicated region
    $region50: #{bbb_linear.1} parent=1 // pred_check
      %p809 = pneg %p808
    $region51: #{bbb_linear.1} parent=1 // pred_check_branch
      %811 = sbr.rel (%p809) target = $region53
    $region52: #{bbb_linear.1} parent=1 // pred_region
      %v812 = vld [vmem:[#allocation2] sm:$0xff]
      %v813 = vadd.f32 %v812, %v801
      %814 = vst [vmem:[#allocation2] sm:$0xff] %v813
    $region53: #{bbb_linear.1} parent=1 // pred_fallthru
      _
    // Predicated region
    $region54: #{bbb_linear.1} parent=1 // pred_check
      %p815 = pneg %p726
    $region55: #{bbb_linear.1} parent=1 // pred_check_branch
      %817 = sbr.rel (%p815) target = $region57
    $region56: #{bbb_linear.1} parent=1 // pred_region
      %v818 = vld [vmem:[%s4] sm:$0x1]
      %v819 = vld [vmem:[%s5] sm:$0x1]
      %vm820 = vcmp.gt.f32.partialorder %v819, 20.0
      %v821 = vmin.f32 %v819, 20.0
      %v822 = vmul.f32 %v821, 1.442695
      %v823 = vpow.pop %v822
      %v824 = vadd.f32 %v823, 1.0
      %v825 = vlog2.pop %v824
      %v826 = vmul.f32 %v825, 0.6931472
      %v827 = vmul.f32 -0.5, %v823
      %v828 = vadd.f32 %v827, 1.0
      %v829 = vmul.f32 %v828, %v823
      %v830 = vand.u32 2147483647, %v823
      %vm831 = vcmp.lt.f32.partialorder %v830, 0.0004427343
      %v832 = vsel %vm831, %v829, %v826
      %v833 = vsel %vm820, %v819, %v832
      %v834 = vld [vmem:[%s6] sm:$0x1]
      %v835 = vmul.f32 %v833, %v834
      %v836 = vadd.f32 %v818, %v835
      %v837 = vld [vmem:[#allocation2] sm:$0xff]
      %v839 = vlaneseq
      %v840 = vshrl.u32 %v839, 7
      %v841 = vsub.s32 0, %v840
      %v842 = vrot.slane %v836, %v841
      %v844 = vadd.f32 %v837, %v842
      %845 = vst [vmem:[#allocation2] sm:$0xff] %v844
    $region57: #{bbb_linear.1} parent=1 // pred_fallthru
      _
    // Predicated region
    $region58: #{bbb_linear.1} parent=1 // pred_check
      _
    $region59: #{bbb_linear.1} parent=1 // pred_check_branch
      %847 = sbr.rel (0) target = $region61
    $region60: #{bbb_linear.1} parent=1 // pred_region
      %s849 = ssub.s32 128, 128
      %850 = vsyncadd [#allocation3], %s849
      %s852 = sshll.u32 [#allocation2], 4
      %s853 = int_to_ptr.vmem [resolvable:$true] %s852
      %855 = dma.vmem_to_hbm [thread:$0]  %s853, 128, %s7, [#allocation3]
    $region61: #{bbb_linear.1} parent=1 // pred_fallthru
      _
    // Predicated region
    $region62: #{bbb_linear.1} parent=1 // pred_check
      _
    $region63: #{bbb_linear.1} parent=1 // pred_check_branch
      %857 = sbr.rel (0) target = $region65
    $region64: #{bbb_linear.1} parent=1 // pred_region
      _
    $region65: #{bbb_linear.1} parent=1 // pred_fallthru
      _
    // Predicated region
    $region66: #{bbb_linear.1} parent=1 // pred_check
      _
    $region67: #{bbb_linear.1} parent=1 // pred_check_branch
      %859 = sbr.rel (0) target = $region69
    $region68: #{bbb_linear.1} parent=1 // pred_region
      _
    $region69: #{bbb_linear.1} parent=1 // pred_fallthru
      _
    // Predicated region
    $region70: #{bbb_linear.1} parent=1 // pred_check
      _
    $region71: #{bbb_linear.1} parent=1 // pred_check_branch
      %861 = sbr.rel (0) target = $region73
    $region72: #{bbb_linear.1} parent=1 // pred_region
      %862 = dma.done [#allocation3], 128
    $region73: #{bbb_linear.1} parent=1 // pred_fallthru
      _
    // Predicated region
    $region74: #{bbb_linear.1} parent=1 // pred_check
      _
    $region75: #{bbb_linear.1} parent=1 // pred_check_branch
      %864 = sbr.rel (0) target = $region77
    $region76: #{bbb_linear.1} parent=1 // pred_region
      _
    $region77: #{bbb_linear.1} parent=1 // pred_fallthru
      _
    // Predicated region
    $region78: #{bbb_linear.1} parent=1 // pred_check
      _
    $region79: #{bbb_linear.1} parent=1 // pred_check_branch
      %866 = sbr.rel (0) target = $region81
    $region80: #{bbb_linear.1} parent=1 // pred_region
      _
    $region81: #{bbb_linear.1} parent=1 // pred_fallthru
      _
    %867 = vsyncpa [#allocation3], 1

</llo_original>
